<compile_context>
chip_gen: v5e
topology: v5e:2x2
jax: 0.10.0
libtpu: 0.0.40
codegen_flags: <defaults>
</compile_context>

<pallas_src>
import functools

import jax
import jax.numpy as jnp
from jax.experimental import pallas as pl
from jax.experimental.pallas import tpu as pltpu

_MB = 1024 * 1024


def _attention_kernel(x_ref, w1_ref, b1_ref, w2_ref, b2_ref, o_ref, *, flat_out):
    BB, N, D = x_ref.shape
    x = x_ref[...]                                     # (BB, N, D) f32

    # Sublane merge of the (BB, N) row dims; free when N % 8 == 0 (correct but a layout
    # copy otherwise).
    xr = x.reshape(BB * N, D)

    # Linear(D, D) + ReLU on the MXU, f32 accumulate. Operand dtype (f32 for small D,
    # bf16 for large D) is chosen in the wrapper via w1's dtype.
    h = jnp.dot(xr.astype(w1_ref.dtype), w1_ref[...],
                preferred_element_type=jnp.float32)    # (BB*N, D)
    h = jnp.maximum(h + b1_ref[...], 0.0)              # b1 (1, D) broadcasts

    # Linear(D, 1) as VPU multiply + XLU lane reduce (avoids a lane-sparse MXU pop).
    s = jnp.sum(h * w2_ref[...], axis=-1, keepdims=True) + b2_ref[0]   # (BB*N, 1)
    s = s.reshape(BB, N, 1)                            # leading-dim split (free)

    # Softmax over the sequence axis N (PyTorch Softmax(dim=1)), all f32. These tensors
    # hold only BB*N values; keeping them in the (., 1) sublane layout avoids a
    # sublane->lane relayout, and the EUP/XLU work hides under the HBM DMA of this
    # memory-bound kernel.
    m = jnp.max(s, axis=1, keepdims=True)
    p = jnp.exp(s - m)
    denom = jnp.sum(p, axis=1, keepdims=True)
    w = p * pl.reciprocal(denom, approx=True)          # EUP vrcp — free slot

    o = x * w                                          # (BB, N, D)
    if flat_out:
        # Lane-dense store: fold the (N, D) minor dims into one N*D lane axis so the
        # output block's last dim is a multiple of 128 (unmasked vst, wide writeback DMA).
        o_ref[...] = o.reshape(BB, 1, N * D).astype(o_ref.dtype)
    else:
        o_ref[...] = o.astype(o_ref.dtype)


def _vmem_budget_and_limit():
    """(per-step block budget, vmem_limit_bytes) derived from the chip's VMEM capacity."""
    try:
        cap = int(getattr(pltpu.get_tpu_info(), "vmem_capacity_bytes", 64 * _MB))
    except Exception:
        cap = 64 * _MB
    if cap <= 0:
        cap = 64 * _MB
    budget = min(cap // 4, 32 * _MB)                       # ~16 MiB v7x, 32 MiB v5e/v6e
    limit = max(32 * _MB, min(cap - 16 * _MB, 96 * _MB))   # ~48 MiB v7x, 96 MiB v5e/v6e
    return budget, limit


def _pick_batch_block(B, N, D, *, weight_bytes, vmem_budget_bytes, itemsize=4):
    """Largest divisor BB of B whose per-step VMEM footprint fits the budget, with the
    grid kept >= 2 steps so both v7x TensorCores get work."""
    block_bytes = N * D * itemsize
    # Per step: x block (2x double-buffered) + out block (2x) + f32 `h` intermediate
    # + MXU operand copy + product temporary  ->  ~7x one block, plus resident weights.
    per_block = 7
    avail = max(vmem_budget_bytes - weight_bytes, per_block * block_bytes)
    bb = 1
    max_cand = B // 2 if B >= 2 else B
    for cand in range(1, max_cand + 1):
        if B % cand == 0 and cand * per_block * block_bytes <= avail:
            bb = cand
    return bb


def _call_pallas(x, w1_c, b1_2d, w2_row, b2_1d, *, BB, vmem_limit,
                 flat_out, single_buffer_weights):
    B, N, D = x.shape
    const_kw = dict(pipeline_mode=pl.Buffered(1)) if single_buffer_weights else {}

    in_specs = [
        pl.BlockSpec((BB, N, D), lambda b: (b, 0, 0)),               # x block
        pl.BlockSpec((D, D), lambda b: (0, 0), **const_kw),          # W1 (grid-invariant)
        pl.BlockSpec((1, D), lambda b: (0, 0), **const_kw),          # b1
        pl.BlockSpec((1, D), lambda b: (0, 0), **const_kw),          # w2 as a row
        pl.BlockSpec(memory_space=pltpu.MemorySpace.SMEM),           # b2 scalar
    ]
    if flat_out:
        out_shape = jax.ShapeDtypeStruct((B, 1, N * D), x.dtype)
        out_spec = pl.BlockSpec((BB, 1, N * D), lambda b: (b, 0, 0))
    else:
        out_shape = jax.ShapeDtypeStruct((B, N, D), x.dtype)
        out_spec = pl.BlockSpec((BB, N, D), lambda b: (b, 0, 0))

    return pl.pallas_call(
        functools.partial(_attention_kernel, flat_out=flat_out),
        out_shape=out_shape,
        grid_spec=pltpu.PrefetchScalarGridSpec(
            num_scalar_prefetch=0,
            grid=(B // BB,),
            in_specs=in_specs,
            out_specs=out_spec,
        ),
        compiler_params=pltpu.CompilerParams(
            dimension_semantics=("parallel",),
            vmem_limit_bytes=vmem_limit,
        ),
    )(x, w1_c, b1_2d, w2_row, b2_1d)


def attention_layer(x, w1, b1, w2, b2):
    """x: (B, N, D) f32.  w1: (D, D), b1: (D,), w2: (D, 1), b2: (1,)."""
    B, N, D = x.shape
    budget, vmem_limit = _vmem_budget_and_limit()

    # Small D: f32 MXU operands (mem-bound, better numerics). Large D: bf16 halves W1's
    # VMEM/DMA footprint and doubles MXU throughput; accumulation stays f32 either way.
    use_bf16 = D >= 512
    w1_c = w1.astype(jnp.bfloat16 if use_bf16 else jnp.float32)
    b1_2d = b1.reshape(1, D).astype(jnp.float32)
    w2_row = w2.reshape(1, D).astype(jnp.float32)   # (D, 1) -> (1, D) row for the VPU mul
    b2_1d = b2.reshape(1).astype(jnp.float32)       # scalar -> SMEM

    weight_bytes = 2 * (w1_c.size * w1_c.dtype.itemsize + 2 * D * 4)
    BB = _pick_batch_block(B, N, D, weight_bytes=weight_bytes,
                           vmem_budget_bytes=budget, itemsize=x.dtype.itemsize)

    # Lane-dense output slab only pays off when the natural last dim is lane-sparse.
    flat_out = (D < 128) and ((N * D) % 128 == 0)

    try:
        out = _call_pallas(x, w1_c, b1_2d, w2_row, b2_1d, BB=BB, vmem_limit=vmem_limit,
                           flat_out=flat_out, single_buffer_weights=True)
    except Exception:
        # Portability fallback: configuration identical to the previously validated
        # kernel (3-D output block, default double buffering) for toolchains where the
        # lane-merge reshape or Buffered(1) single-buffering is not supported.
        flat_out = False
        out = _call_pallas(x, w1_c, b1_2d, w2_row, b2_1d, BB=BB, vmem_limit=vmem_limit,
                           flat_out=False, single_buffer_weights=False)
    return out.reshape(B, N, D) if flat_out else out


def attention_layer_ref(x, w1, b1, w2, b2):
    """Pure-JAX f32 reference mirroring the PyTorch forward."""
    h = jax.nn.relu(jnp.einsum("bnd,de->bne", x, w1) + b1)         # (B, N, D)
    s = jnp.einsum("bnd,do->bno", h, w2) + b2                      # (B, N, 1)
    attn = jax.nn.softmax(s, axis=1)                               # softmax over N
    return x * attn


if __name__ == "__main__":
    key = jax.random.PRNGKey(0)
    B, N, D = 2, 8, 32  # batch=2, seq=8, feature_dim=32

    kx, k1, k2, k3, k4 = jax.random.split(key, 5)
    x = jax.random.normal(kx, (B, N, D), dtype=jnp.float32)

    # Deterministic parameter init (Linear(D, D) and Linear(D, 1) shapes).
    bound1 = 1.0 / jnp.sqrt(D)
    w1 = jax.random.uniform(k1, (D, D), jnp.float32, -bound1, bound1)
    b1 = jax.random.uniform(k2, (D,), jnp.float32, -bound1, bound1)
    w2 = jax.random.uniform(k3, (D, 1), jnp.float32, -bound1, bound1)
    b2 = jax.random.uniform(k4, (1,), jnp.float32, -bound1, bound1)

    out = attention_layer(x, w1, b1, w2, b2)
    out = jax.block_until_ready(out)

    ref = attention_layer_ref(x, w1, b1, w2, b2)
    assert out.shape == (B, N, D)
    # Matmul is f32 at this D; the only approximation left is the EUP vrcp on the
    # softmax denominator, well within this tolerance.
    assert jnp.allclose(out, ref, atol=1e-2, rtol=1e-2), "mismatch vs reference"

    print("KERNEL_OK")
</pallas_src>

<mosaic_0001>
module attributes {stable_mosaic.version = 11 : i64} {
  func.func @_attention_kernel(%arg0: i32, %arg1: memref<1x8x32xf32, #tpu.memory_space<vmem>>, %arg2: memref<32x32xf32, #tpu.memory_space<vmem>>, %arg3: memref<1x32xf32, #tpu.memory_space<vmem>>, %arg4: memref<1x32xf32, #tpu.memory_space<vmem>>, %arg5: memref<1xf32, #tpu.memory_space<smem>>, %arg6: memref<1x1x256xf32, #tpu.memory_space<vmem>>) attributes {dimension_semantics = [#tpu.dimension_semantics<parallel>], iteration_bounds = array<i64: 2>, scalar_prefetch = 0 : i64, scratch_operands = 0 : i64, tpu.core_type = #tpu.core_type<tc>, window_params = [{transform_indices = @transform_0, window_bounds = array<i64: 1, 8, 32>}, {pipeline_mode = #tpu.pipeline_mode<synchronous>, transform_indices = @transform_1, window_bounds = array<i64: 32, 32>}, {pipeline_mode = #tpu.pipeline_mode<synchronous>, transform_indices = @transform_2, window_bounds = array<i64: 1, 32>}, {pipeline_mode = #tpu.pipeline_mode<synchronous>, transform_indices = @transform_3, window_bounds = array<i64: 1, 32>}, {transform_indices = @transform_4, window_bounds = array<i64: 1>}, {transform_indices = @transform_5, window_bounds = array<i64: 1, 1, 256>}]} {
    %c0 = arith.constant 0 : index
    %c0_0 = arith.constant 0 : index
    %c0_1 = arith.constant 0 : index
    %0 = vector.load %arg1[%c0, %c0_0, %c0_1] : memref<1x8x32xf32, #tpu.memory_space<vmem>>, vector<1x8x32xf32>
    %1 = vector.shape_cast %0 : vector<1x8x32xf32> to vector<8x32xf32>
    %c0_2 = arith.constant 0 : index
    %c0_3 = arith.constant 0 : index
    %2 = vector.load %arg2[%c0_2, %c0_3] : memref<32x32xf32, #tpu.memory_space<vmem>>, vector<32x32xf32>
    %cst = arith.constant dense<0.000000e+00> : vector<8x32xf32>
    %3 = tpu.matmul %1, %2, %cst {dimension_numbers = #tpu.dot_dimension_numbers<[1], [0], [0], [1], [0, 0, 1, 1], [], []>} : vector<8x32xf32>, vector<32x32xf32>, vector<8x32xf32> -> vector<8x32xf32>
    %c0_4 = arith.constant 0 : index
    %c0_5 = arith.constant 0 : index
    %4 = vector.load %arg3[%c0_4, %c0_5] : memref<1x32xf32, #tpu.memory_space<vmem>>, vector<1x32xf32>
    %5 = vector.broadcast %4 : vector<1x32xf32> to vector<8x32xf32>
    %6 = arith.addf %3, %5 : vector<8x32xf32>
    %cst_6 = arith.constant 0.000000e+00 : f32
    %7 = vector.broadcast %cst_6 : f32 to vector<8x32xf32>
    %8 = arith.maximumf %6, %7 : vector<8x32xf32>
    %c0_7 = arith.constant 0 : index
    %c0_8 = arith.constant 0 : index
    %9 = vector.load %arg4[%c0_7, %c0_8] : memref<1x32xf32, #tpu.memory_space<vmem>>, vector<1x32xf32>
    %10 = vector.broadcast %9 : vector<1x32xf32> to vector<8x32xf32>
    %11 = arith.mulf %8, %10 : vector<8x32xf32>
    %cst_9 = arith.constant dense<0.000000e+00> : vector<8xf32>
    %12 = vector.multi_reduction <add>, %11, %cst_9 [1] : vector<8x32xf32> to vector<8xf32>
    %13 = vector.shape_cast %12 : vector<8xf32> to vector<8x1xf32>
    %c0_10 = arith.constant 0 : index
    %14 = memref.load %arg5[%c0_10] : memref<1xf32, #tpu.memory_space<smem>>
    %15 = vector.broadcast %14 : f32 to vector<8x1xf32>
    %16 = arith.addf %13, %15 : vector<8x1xf32>
    %17 = vector.shape_cast %16 : vector<8x1xf32> to vector<1x8x1xf32>
    %cst_11 = arith.constant dense<0xFF800000> : vector<1x1xf32>
    %18 = vector.multi_reduction <maximumf>, %17, %cst_11 [1] : vector<1x8x1xf32> to vector<1x1xf32>
    %19 = vector.shape_cast %18 : vector<1x1xf32> to vector<1x1x1xf32>
    %20 = vector.broadcast %19 : vector<1x1x1xf32> to vector<1x8x1xf32>
    %21 = arith.subf %17, %20 : vector<1x8x1xf32>
    %22 = math.exp %21 : vector<1x8x1xf32>
    %cst_12 = arith.constant dense<0.000000e+00> : vector<1x1xf32>
    %23 = vector.multi_reduction <add>, %22, %cst_12 [1] : vector<1x8x1xf32> to vector<1x1xf32>
    %24 = vector.shape_cast %23 : vector<1x1xf32> to vector<1x1x1xf32>
    %25 = tpu.reciprocal %24 {approx = true} : vector<1x1x1xf32> -> vector<1x1x1xf32>
    %26 = vector.broadcast %25 : vector<1x1x1xf32> to vector<1x8x1xf32>
    %27 = arith.mulf %22, %26 : vector<1x8x1xf32>
    %28 = vector.broadcast %27 : vector<1x8x1xf32> to vector<1x8x32xf32>
    %29 = arith.mulf %0, %28 : vector<1x8x32xf32>
    %30 = vector.shape_cast %29 : vector<1x8x32xf32> to vector<1x1x256xf32>
    %c0_13 = arith.constant 0 : index
    %c0_14 = arith.constant 0 : index
    %c0_15 = arith.constant 0 : index
    %31 = vector.load %arg6[%c0_13, %c0_14, %c0_15] : memref<1x1x256xf32, #tpu.memory_space<vmem>>, vector<1x1x256xf32>
    tpu.vector_store %arg6[%c0_13, %c0_14, %c0_15], %30 {strides = array<i32>} : memref<1x1x256xf32, #tpu.memory_space<vmem>>, vector<1x1x256xf32>,
    return
  }
  func.func @transform_0(%arg0: i32) -> (i32, i32, i32) {
    %c0_i32 = arith.constant 0 : i32
    %c0_i32_0 = arith.constant 0 : i32
    %c0_i32_1 = arith.constant 0 : i32
    return %arg0, %c0_i32, %c0_i32_0 : i32, i32, i32
  }
  func.func @transform_1(%arg0: i32) -> (i32, i32) {
    %c0_i32 = arith.constant 0 : i32
    %c0_i32_0 = arith.constant 0 : i32
    %c0_i32_1 = arith.constant 0 : i32
    return %c0_i32, %c0_i32_0 : i32, i32
  }
  func.func @transform_2(%arg0: i32) -> (i32, i32) {
    %c0_i32 = arith.constant 0 : i32
    %c0_i32_0 = arith.constant 0 : i32
    %c0_i32_1 = arith.constant 0 : i32
    return %c0_i32, %c0_i32_0 : i32, i32
  }
  func.func @transform_3(%arg0: i32) -> (i32, i32) {
    %c0_i32 = arith.constant 0 : i32
    %c0_i32_0 = arith.constant 0 : i32
    %c0_i32_1 = arith.constant 0 : i32
    return %c0_i32, %c0_i32_0 : i32, i32
  }
  func.func @transform_4(%arg0: i32) -> i32 {
    %c0_i32 = arith.constant 0 : i32
    %c0_i32_0 = arith.constant 0 : i32
    return %c0_i32 : i32
  }
  func.func @transform_5(%arg0: i32) -> (i32, i32, i32) {
    %c0_i32 = arith.constant 0 : i32
    %c0_i32_0 = arith.constant 0 : i32
    %c0_i32_1 = arith.constant 0 : i32
    return %arg0, %c0_i32, %c0_i32_0 : i32, i32, i32
  }
}

module attributes {stable_mosaic.version = 11 : i64} {
  func.func @_attention_kernel(%arg0: i32, %arg1: memref<1x8x32xf32, #tpu.memory_space<vmem>>, %arg2: memref<32x32xf32, #tpu.memory_space<vmem>>, %arg3: memref<1x32xf32, #tpu.memory_space<vmem>>, %arg4: memref<1x32xf32, #tpu.memory_space<vmem>>, %arg5: memref<1xf32, #tpu.memory_space<smem>>, %arg6: memref<1x8x32xf32, #tpu.memory_space<vmem>>) attributes {dimension_semantics = [#tpu.dimension_semantics<parallel>], iteration_bounds = array<i64: 2>, scalar_prefetch = 0 : i64, scratch_operands = 0 : i64, tpu.core_type = #tpu.core_type<tc>, window_params = [{transform_indices = @transform_0, window_bounds = array<i64: 1, 8, 32>}, {pipeline_mode = #tpu.pipeline_mode<synchronous>, transform_indices = @transform_1, window_bounds = array<i64: 32, 32>}, {pipeline_mode = #tpu.pipeline_mode<synchronous>, transform_indices = @transform_2, window_bounds = array<i64: 1, 32>}, {pipeline_mode = #tpu.pipeline_mode<synchronous>, transform_indices = @transform_3, window_bounds = array<i64: 1, 32>}, {transform_indices = @transform_4, window_bounds = array<i64: 1>}, {transform_indices = @transform_5, window_bounds = array<i64: 1, 8, 32>}]} {
    %c0 = arith.constant 0 : index
    %c0_0 = arith.constant 0 : index
    %c0_1 = arith.constant 0 : index
    %0 = vector.load %arg1[%c0, %c0_0, %c0_1] : memref<1x8x32xf32, #tpu.memory_space<vmem>>, vector<1x8x32xf32>
    %1 = vector.shape_cast %0 : vector<1x8x32xf32> to vector<8x32xf32>
    %c0_2 = arith.constant 0 : index
    %c0_3 = arith.constant 0 : index
    %2 = vector.load %arg2[%c0_2, %c0_3] : memref<32x32xf32, #tpu.memory_space<vmem>>, vector<32x32xf32>
    %cst = arith.constant dense<0.000000e+00> : vector<8x32xf32>
    %3 = tpu.matmul %1, %2, %cst {dimension_numbers = #tpu.dot_dimension_numbers<[1], [0], [0], [1], [0, 0, 1, 1], [], []>} : vector<8x32xf32>, vector<32x32xf32>, vector<8x32xf32> -> vector<8x32xf32>
    %c0_4 = arith.constant 0 : index
    %c0_5 = arith.constant 0 : index
    %4 = vector.load %arg3[%c0_4, %c0_5] : memref<1x32xf32, #tpu.memory_space<vmem>>, vector<1x32xf32>
    %5 = vector.broadcast %4 : vector<1x32xf32> to vector<8x32xf32>
    %6 = arith.addf %3, %5 : vector<8x32xf32>
    %cst_6 = arith.constant 0.000000e+00 : f32
    %7 = vector.broadcast %cst_6 : f32 to vector<8x32xf32>
    %8 = arith.maximumf %6, %7 : vector<8x32xf32>
    %c0_7 = arith.constant 0 : index
    %c0_8 = arith.constant 0 : index
    %9 = vector.load %arg4[%c0_7, %c0_8] : memref<1x32xf32, #tpu.memory_space<vmem>>, vector<1x32xf32>
    %10 = vector.broadcast %9 : vector<1x32xf32> to vector<8x32xf32>
    %11 = arith.mulf %8, %10 : vector<8x32xf32>
    %cst_9 = arith.constant dense<0.000000e+00> : vector<8xf32>
    %12 = vector.multi_reduction <add>, %11, %cst_9 [1] : vector<8x32xf32> to vector<8xf32>
    %13 = vector.shape_cast %12 : vector<8xf32> to vector<8x1xf32>
    %c0_10 = arith.constant 0 : index
    %14 = memref.load %arg5[%c0_10] : memref<1xf32, #tpu.memory_space<smem>>
    %15 = vector.broadcast %14 : f32 to vector<8x1xf32>
    %16 = arith.addf %13, %15 : vector<8x1xf32>
    %17 = vector.shape_cast %16 : vector<8x1xf32> to vector<1x8x1xf32>
    %cst_11 = arith.constant dense<0xFF800000> : vector<1x1xf32>
    %18 = vector.multi_reduction <maximumf>, %17, %cst_11 [1] : vector<1x8x1xf32> to vector<1x1xf32>
    %19 = vector.shape_cast %18 : vector<1x1xf32> to vector<1x1x1xf32>
    %20 = vector.broadcast %19 : vector<1x1x1xf32> to vector<1x8x1xf32>
    %21 = arith.subf %17, %20 : vector<1x8x1xf32>
    %22 = math.exp %21 : vector<1x8x1xf32>
    %cst_12 = arith.constant dense<0.000000e+00> : vector<1x1xf32>
    %23 = vector.multi_reduction <add>, %22, %cst_12 [1] : vector<1x8x1xf32> to vector<1x1xf32>
    %24 = vector.shape_cast %23 : vector<1x1xf32> to vector<1x1x1xf32>
    %25 = tpu.reciprocal %24 {approx = true} : vector<1x1x1xf32> -> vector<1x1x1xf32>
    %26 = vector.broadcast %25 : vector<1x1x1xf32> to vector<1x8x1xf32>
    %27 = arith.mulf %22, %26 : vector<1x8x1xf32>
    %28 = vector.broadcast %27 : vector<1x8x1xf32> to vector<1x8x32xf32>
    %29 = arith.mulf %0, %28 : vector<1x8x32xf32>
    %c0_13 = arith.constant 0 : index
    %c0_14 = arith.constant 0 : index
    %c0_15 = arith.constant 0 : index
    %30 = vector.load %arg6[%c0_13, %c0_14, %c0_15] : memref<1x8x32xf32, #tpu.memory_space<vmem>>, vector<1x8x32xf32>
    tpu.vector_store %arg6[%c0_13, %c0_14, %c0_15], %29 {strides = array<i32>} : memref<1x8x32xf32, #tpu.memory_space<vmem>>, vector<1x8x32xf32>,
    return
  }
  func.func @transform_0(%arg0: i32) -> (i32, i32, i32) {
    %c0_i32 = arith.constant 0 : i32
    %c0_i32_0 = arith.constant 0 : i32
    %c0_i32_1 = arith.constant 0 : i32
    return %arg0, %c0_i32, %c0_i32_0 : i32, i32, i32
  }
  func.func @transform_1(%arg0: i32) -> (i32, i32) {
    %c0_i32 = arith.constant 0 : i32
    %c0_i32_0 = arith.constant 0 : i32
    %c0_i32_1 = arith.constant 0 : i32
    return %c0_i32, %c0_i32_0 : i32, i32
  }
  func.func @transform_2(%arg0: i32) -> (i32, i32) {
    %c0_i32 = arith.constant 0 : i32
    %c0_i32_0 = arith.constant 0 : i32
    %c0_i32_1 = arith.constant 0 : i32
    return %c0_i32, %c0_i32_0 : i32, i32
  }
  func.func @transform_3(%arg0: i32) -> (i32, i32) {
    %c0_i32 = arith.constant 0 : i32
    %c0_i32_0 = arith.constant 0 : i32
    %c0_i32_1 = arith.constant 0 : i32
    return %c0_i32, %c0_i32_0 : i32, i32
  }
  func.func @transform_4(%arg0: i32) -> i32 {
    %c0_i32 = arith.constant 0 : i32
    %c0_i32_0 = arith.constant 0 : i32
    return %c0_i32 : i32
  }
  func.func @transform_5(%arg0: i32) -> (i32, i32, i32) {
    %c0_i32 = arith.constant 0 : i32
    %c0_i32_0 = arith.constant 0 : i32
    %c0_i32_1 = arith.constant 0 : i32
    return %arg0, %c0_i32, %c0_i32_0 : i32, i32, i32
  }
}

</mosaic_0001>

<llo_original>
// kernel: tpu_custom_call.1
$region0: #{tpu_custom_call.1}
  #allocation0 [shape = 'u32[]', space=smem, size = 0x4, offset = 0x4, fixed_abs, tag = 'smem constant byte address 0x4 - core index']
  #allocation1 [shape = 'u32[72,128]{1,0:T(1,128)}', space=vmem, size = 0x9000, scoped, tag = 'internal scratch']
  #allocation2 [shape = 'f32[1]{0:T(128)S(6)}', space=smem, size = 0x200, scoped, tag = 'scoped memory for tpu_custom_call.1']
  %s0 = inlined_call_operand.hbm [shape: f32[2,8,32], index: 0, kind: input, shape index: {}]
  %s1 = inlined_call_operand.hbm [shape: f32[32,32], index: 1, kind: input, shape index: {}]
  %s2 = inlined_call_operand.vmem [shape: f32[1,32], index: 2, kind: input, shape index: {}]
  %s3 = inlined_call_operand.vmem [shape: f32[1,32], index: 3, kind: input, shape index: {}]
  %s4 = inlined_call_operand.<no memory space> [shape: f32[1], index: 4, kind: input, shape index: {}]
  %s5 = inlined_call_operand.hbm [shape: f32[2,1,256], index: 5, kind: output, shape index: {}]
  %s6 = sld [smem:[#allocation0]]
  $region61: #{tpu_custom_call.1} parent=0
    _
  %s8 = ssub.s32 1, %s6
  %s9 = scalar_select 0, %s8, %s6
  %10 = sst [smem:[#allocation2]] %s4
  $region1: #{tpu_custom_call.1} parent=0
    #allocation3 [shape = 'u8[8192]{0}', space=vmem, size = 0x2000, scoped, tag = 'input window, operand 0']
    #allocation4 [shape = 's32[2]{0}', space=sflag, size = 0x8, scoped, tag = 'scoped memory for tpu_custom_call.1']
    #allocation5 [shape = 's32[2]{0}', space=sflag, size = 0x8, scoped, tag = 'scoped memory for tpu_custom_call.1']
    #allocation6 [shape = 'u8[16384]{0}', space=vmem, size = 0x4000, scoped, tag = 'input window, operand 1, single buffered']
    #allocation7 [shape = 's32[1]{0}', space=sflag, size = 0x4, scoped, tag = 'scoped memory for tpu_custom_call.1']
    #allocation8 [shape = 'u8[2048]{0}', space=vmem, size = 0x800, scoped, tag = 'output window, operand 0']
    %11 = vsyncpa [#allocation4], 0
    %s12 = scalar_lea.sflag [#allocation4], 1
    %13 = vsyncpa %s12, 0
    %14 = vsyncpa [#allocation7], 0
    %15 = vsyncpa [#allocation5], 0
    %s16 = scalar_lea.sflag [#allocation5], 1
    %17 = vsyncpa %s16, 0
    loop: start=0, step=1, limit=4
    $region2: #{tpu_custom_call.1} parent=1 // loop_pre_header
      _
    $region3: #{tpu_custom_call.1} parent=1 // loop_header
      %s19 = sphi 0, %s23
      %p20 = scmp.ge.s32.totalorder %s19, 4
      %s29 = sphi 0, %s31
      %s32 = sphi 0, %s29
      %s33 = sphi 0, %s32
      %s49 = sphi 0, %s33
      %s53 = sphi 0, %s53
      %s55 = sphi 0, %s53
      %s56 = sphi 0, %s55
      %s70 = sphi 0, %s56
      %s74 = sphi 0, %s74
      %s76 = sphi 0, %s74
      %s77 = sphi 0, %s76
      %s91 = sphi 0, %s77
      %s95 = sphi 0, %s95
      %s97 = sphi 0, %s95
      %s98 = sphi 0, %s97
      %s112 = sphi 0, %s98
      %s116 = sphi 0, %s116
      %s118 = sphi 0, %s116
      %s119 = sphi 0, %s118
      %s133 = sphi 0, %s119
      %s139 = sphi 0, %s141
      %s142 = sphi 0, %s139
      %s143 = sphi 0, %s142
      %s159 = sphi 0, %s143
    $region4: #{tpu_custom_call.1} parent=1 // loop_header_branch
      %22 = sbr.rel (%p20) target = $region8
    $region5: #{tpu_custom_call.1} parent=1 // loop_body
      %s24 = ssub.s32 %s19, 1
      %s25 = ssub.s32 %s19, 2
      %s26 = sadd.s32 %s19, 1
      %s27 = ssub.s32 %s19, %s26
      %p28 = scmp.eq.s32.totalorder %s27, 0
      %s30 = sadd.s32 %s29, 1
      %s31 = scalar_select %p28, %s29, %s30
      %p34 = pneg %p28
      %p35 = scmp.eq.s32.totalorder %s19, 1
      %p36 = por %p34, %p35
      %p37 = scmp.ne.s32.totalorder %s29, %s32
      %p38 = scmp.eq.s32.totalorder %s19, 0
      %p39 = por %p37, %p38
      %p40 = scmp.ne.s32.totalorder %s29, %s32
      %p41 = scmp.eq.s32.totalorder %s24, 1
      %p42 = por %p40, %p41
      %p43 = scmp.ne.s32.totalorder %s32, %s33
      %p44 = scmp.eq.s32.totalorder %s24, 0
      %p45 = por %p43, %p44
      %p46 = scmp.ne.s32.totalorder %s32, %s33
      %p47 = scmp.eq.s32.totalorder %s25, 1
      %p48 = por %p46, %p47
      %p50 = scmp.ne.s32.totalorder %s33, %s49
      %p51 = scmp.eq.s32.totalorder %s25, 0
      %p52 = por %p50, %p51
      %s54 = sadd.s32 %s53, 1
      %p57 = scmp.eq.s32.totalorder %s19, 1
      %p58 = scmp.ne.s32.totalorder %s53, %s55
      %p59 = scmp.eq.s32.totalorder %s19, 0
      %p60 = por %p58, %p59
      %p61 = scmp.ne.s32.totalorder %s53, %s55
      %p62 = scmp.eq.s32.totalorder %s24, 1
      %p63 = por %p61, %p62
      %p64 = scmp.ne.s32.totalorder %s55, %s56
      %p65 = scmp.eq.s32.totalorder %s24, 0
      %p66 = por %p64, %p65
      %p67 = scmp.ne.s32.totalorder %s55, %s56
      %p68 = scmp.eq.s32.totalorder %s25, 1
      %p69 = por %p67, %p68
      %p71 = scmp.ne.s32.totalorder %s56, %s70
      %p72 = scmp.eq.s32.totalorder %s25, 0
      %p73 = por %p71, %p72
      %s75 = sadd.s32 %s74, 1
      %p78 = scmp.eq.s32.totalorder %s19, 1
      %p79 = scmp.ne.s32.totalorder %s74, %s76
      %p80 = scmp.eq.s32.totalorder %s19, 0
      %p81 = por %p79, %p80
      %p82 = scmp.ne.s32.totalorder %s74, %s76
      %p83 = scmp.eq.s32.totalorder %s24, 1
      %p84 = por %p82, %p83
      %p85 = scmp.ne.s32.totalorder %s76, %s77
      %p86 = scmp.eq.s32.totalorder %s24, 0
      %p87 = por %p85, %p86
      %p88 = scmp.ne.s32.totalorder %s76, %s77
      %p89 = scmp.eq.s32.totalorder %s25, 1
      %p90 = por %p88, %p89
      %p92 = scmp.ne.s32.totalorder %s77, %s91
      %p93 = scmp.eq.s32.totalorder %s25, 0
      %p94 = por %p92, %p93
      %s96 = sadd.s32 %s95, 1
      %p99 = scmp.eq.s32.totalorder %s19, 1
      %p100 = scmp.ne.s32.totalorder %s95, %s97
      %p101 = scmp.eq.s32.totalorder %s19, 0
      %p102 = por %p100, %p101
      %p103 = scmp.ne.s32.totalorder %s95, %s97
      %p104 = scmp.eq.s32.totalorder %s24, 1
      %p105 = por %p103, %p104
      %p106 = scmp.ne.s32.totalorder %s97, %s98
      %p107 = scmp.eq.s32.totalorder %s24, 0
      %p108 = por %p106, %p107
      %p109 = scmp.ne.s32.totalorder %s97, %s98
      %p110 = scmp.eq.s32.totalorder %s25, 1
      %p111 = por %p109, %p110
      %p113 = scmp.ne.s32.totalorder %s98, %s112
      %p114 = scmp.eq.s32.totalorder %s25, 0
      %p115 = por %p113, %p114
      %s117 = sadd.s32 %s116, 1
      %p120 = scmp.eq.s32.totalorder %s19, 1
      %p121 = scmp.ne.s32.totalorder %s116, %s118
      %p122 = scmp.eq.s32.totalorder %s19, 0
      %p123 = por %p121, %p122
      %p124 = scmp.ne.s32.totalorder %s116, %s118
      %p125 = scmp.eq.s32.totalorder %s24, 1
      %p126 = por %p124, %p125
      %p127 = scmp.ne.s32.totalorder %s118, %s119
      %p128 = scmp.eq.s32.totalorder %s24, 0
      %p129 = por %p127, %p128
      %p130 = scmp.ne.s32.totalorder %s118, %s119
      %p131 = scmp.eq.s32.totalorder %s25, 1
      %p132 = por %p130, %p131
      %p134 = scmp.ne.s32.totalorder %s119, %s133
      %p135 = scmp.eq.s32.totalorder %s25, 0
      %p136 = por %p134, %p135
      %s137 = ssub.s32 %s19, %s26
      %p138 = scmp.eq.s32.totalorder %s137, 0
      %s140 = sadd.s32 %s139, 1
      %s141 = scalar_select %p138, %s139, %s140
      %p144 = pneg %p138
      %p145 = scmp.eq.s32.totalorder %s19, 1
      %p146 = por %p144, %p145
      %p147 = scmp.ne.s32.totalorder %s139, %s142
      %p148 = scmp.eq.s32.totalorder %s19, 0
      %p149 = por %p147, %p148
      %p150 = scmp.ne.s32.totalorder %s139, %s142
      %p151 = scmp.eq.s32.totalorder %s24, 1
      %p152 = por %p150, %p151
      %p153 = scmp.ne.s32.totalorder %s142, %s143
      %p154 = scmp.eq.s32.totalorder %s24, 0
      %p155 = por %p153, %p154
      %p156 = scmp.ne.s32.totalorder %s142, %s143
      %p157 = scmp.eq.s32.totalorder %s25, 1
      %p158 = por %p156, %p157
      %p160 = scmp.ne.s32.totalorder %s143, %s159
      %p161 = scmp.eq.s32.totalorder %s25, 0
      %p162 = por %p160, %p161
      %p163 = scmp.le.s32.totalorder 1, %s19
      %p164 = scmp.lt.s32.totalorder %s19, 3
      %p165 = pnand %p163, %p164
      %p166 = pneg %p165
      // Predicated region
      $region9: #{tpu_custom_call.1} parent=5 // pred_check
        _
      $region10: #{tpu_custom_call.1} parent=5 // pred_check_branch
        %168 = sbr.rel (%p165) target = $region12
      $region11: #{tpu_custom_call.1} parent=5 // pred_region
        %s169 = ssub.s32 %s19, 1
        // Predicated region
        $region13: #{tpu_custom_call.1} parent=11 // pred_check
          %p170 = pneg %p66
        $region14: #{tpu_custom_call.1} parent=11 // pred_check_branch
          %172 = sbr.rel (%p170) target = $region16
        $region15: #{tpu_custom_call.1} parent=11 // pred_region
          %174 = vsyncadd [#allocation7], 0
          %s175 = sshll.u32 %s1, 4
          %s176 = int_to_ptr.hbm [resolvable:$true] %s175
          %s177 = sshll.u32 [#allocation6], 4
          %s178 = int_to_ptr.vmem [resolvable:$true] %s177
          %183 = dma.hbm_to_vmem [thread:$0]  %s176, 512, %s178, [#allocation7], 128, 128, 8
        $region16: #{tpu_custom_call.1} parent=11 // pred_fallthru
          _
        // Predicated region
        $region17: #{tpu_custom_call.1} parent=11 // pred_check
          %p184 = pneg %p87
        $region18: #{tpu_custom_call.1} parent=11 // pred_check_branch
          %186 = sbr.rel (%p184) target = $region20
        $region19: #{tpu_custom_call.1} parent=11 // pred_region
          _
        $region20: #{tpu_custom_call.1} parent=11 // pred_fallthru
          _
        // Predicated region
        $region21: #{tpu_custom_call.1} parent=11 // pred_check
          %p187 = pneg %p108
        $region22: #{tpu_custom_call.1} parent=11 // pred_check_branch
          %189 = sbr.rel (%p187) target = $region24
        $region23: #{tpu_custom_call.1} parent=11 // pred_region
          _
        $region24: #{tpu_custom_call.1} parent=11 // pred_fallthru
          _
        // Predicated region
        $region25: #{tpu_custom_call.1} parent=11 // pred_check
          %p190 = pneg %p129
        $region26: #{tpu_custom_call.1} parent=11 // pred_check_branch
          %192 = sbr.rel (%p190) target = $region28
        $region27: #{tpu_custom_call.1} parent=11 // pred_region
          _
        $region28: #{tpu_custom_call.1} parent=11 // pred_fallthru
          _
      $region12: #{tpu_custom_call.1} parent=5 // pred_fallthru
        _
      %p193 = scmp.lt.s32.totalorder %s19, 2
      // Predicated region
      $region29: #{tpu_custom_call.1} parent=5 // pred_check
        %p194 = pneg %p193
      $region30: #{tpu_custom_call.1} parent=5 // pred_check_branch
        %196 = sbr.rel (%p194) target = $region32
      $region31: #{tpu_custom_call.1} parent=5 // pred_region
        // Predicated region
        $region33: #{tpu_custom_call.1} parent=31 // pred_check
          %p197 = pneg %p39
        $region34: #{tpu_custom_call.1} parent=31 // pred_check_branch
          %199 = sbr.rel (%p197) target = $region36
        $region35: #{tpu_custom_call.1} parent=31 // pred_region
          %s200 = sand.u32 %s29, 1
          %s201 = scalar_lea.sflag [#allocation4], %s200
          %s202 = sand.u32 %s29, 1
          %s203 = smul.addr %s202, 8
          %s204 = scalar_lea.vmem [#allocation3], %s203
          %206 = vsyncadd %s201, 0
          %s207 = smul.addr %s19, 8
          %s208 = scalar_lea.hbm %s0, %s207
          %s210 = sshll.u32 %s208, 4
          %s211 = int_to_ptr.hbm [resolvable:$true] %s210
          %s212 = sshll.u32 %s204, 4
          %s213 = int_to_ptr.vmem [resolvable:$true] %s212
          %215 = dma.hbm_to_vmem [thread:$0]  %s211, 128, %s213, %s201
        $region36: #{tpu_custom_call.1} parent=31 // pred_fallthru
          _
      $region32: #{tpu_custom_call.1} parent=5 // pred_fallthru
        _
      %p216 = scmp.le.s32.totalorder 1, %s19
      %p217 = scmp.lt.s32.totalorder %s19, 3
      %p218 = pnand %p216, %p217
      %p219 = pneg %p218
      // Predicated region
      $region37: #{tpu_custom_call.1} parent=5 // pred_check
        _
      $region38: #{tpu_custom_call.1} parent=5 // pred_check_branch
        %221 = sbr.rel (%p218) target = $region40
      $region39: #{tpu_custom_call.1} parent=5 // pred_region
        %s222 = ssub.s32 %s19, 1
        %s223 = sand.u32 %s32, 1
        %s224 = scalar_lea.sflag [#allocation4], %s223
        %s225 = sand.u32 %s32, 1
        %s226 = smul.addr %s225, 8
        %s227 = scalar_lea.vmem [#allocation3], %s226
        // Predicated region
        $region41: #{tpu_custom_call.1} parent=39 // pred_check
          %p228 = pneg %p45
        $region42: #{tpu_custom_call.1} parent=39 // pred_check_branch
          %230 = sbr.rel (%p228) target = $region44
        $region43: #{tpu_custom_call.1} parent=39 // pred_region
          %232 = dma.done %s224, 128
        $region44: #{tpu_custom_call.1} parent=39 // pred_fallthru
          _
        // Predicated region
        $region45: #{tpu_custom_call.1} parent=39 // pred_check
          %p233 = pneg %p66
        $region46: #{tpu_custom_call.1} parent=39 // pred_check_branch
          %235 = sbr.rel (%p233) target = $region48
        $region47: #{tpu_custom_call.1} parent=39 // pred_region
          %237 = dma.done [#allocation7], 512
        $region48: #{tpu_custom_call.1} parent=39 // pred_fallthru
          _
        %s238 = sand.u32 %s32, 1
        %s239 = scalar_lea.sflag [#allocation4], %s238
        %s240 = sand.u32 %s32, 1
        %s241 = smul.addr %s240, 8
        %s242 = scalar_lea.vmem [#allocation3], %s241
        %p243 = pneg %p45
        %p244 = pneg %p42
        %p245 = pneg %p66
        %p246 = pneg %p63
        %p247 = pneg %p87
        %p248 = pneg %p84
        %p249 = pneg %p108
        %p250 = pneg %p105
        %p251 = pneg %p129
        %p252 = pneg %p126
        %p253 = pneg %p155
        %p254 = pneg %p152
        %s255 = sand.u32 %s142, 1
        %s256 = scalar_lea.sflag [#allocation5], %s255
        %s257 = sand.u32 %s142, 1
        %s258 = smul.addr %s257, 2
        %s259 = scalar_lea.vmem [#allocation8], %s258
        %v260 = vld [vmem:[%s227] sm:$0xff]
        %v261 = vld [vmem:[#allocation6] sm:$0xff]
        %v262 = vld [vmem:[#allocation6 + $0x8] sm:$0xff]
        %v263 = vld [vmem:[#allocation6 + $0x10] sm:$0xff]
        %v264 = vld [vmem:[#allocation6 + $0x18] sm:$0xff]
        %v265 = vld [vmem:[%s2] sm:$0x1]
        %v267 = vperm.slane %v265, 0
        %vm269 = vcmask 261120
        %v271 = vsel %vm269, %v260, 0
        %273 = vmatpush.msra.mxu0 0.0
        %274 = vmatpush.msra.mxu0 0.0
        %275 = vmatpush.msra.mxu0 0.0
        %276 = vmatpush.msra.mxu0 0.0
        %277 = vmatpush.msra.mxu0 0.0
        %278 = vmatpush.msra.mxu0 0.0
        %279 = vmatpush.msra.mxu0 0.0
        %280 = vmatpush.msra.mxu0 0.0
        %281 = vmatpush.msra.mxu0 0.0
        %282 = vmatpush.msra.mxu0 0.0
        %283 = vmatpush.msra.mxu0 0.0
        %284 = vmatpush.msra.mxu0 0.0
        %285 = vmatpush.msra.mxu0 %v264
        %286 = vmatpush.msra.mxu0 %v263
        %287 = vmatpush.msra.mxu0 %v262
        %288 = vmatpush.msra.mxu0 %v261
        %289 = vmatmul.f32.gmra.mxu0 %v271
        %v290 = vpop.f32.mrf.mxu0
        %v291 = vadd.f32 %v267, %v290
        %292 = vdwg.mxu0
        %v293 = vmax.f32 %v291, 0.0
        %v294 = vld [vmem:[%s3] sm:$0x1]
        %v296 = vperm.slane %v294, 0
        %v298 = vmul.f32 %v293, %v296
        %v299 = vsel %vm269, %v298, 0.0
        %300 = vadd.xlane.f32.xlu0 %v299
        %v301 = vpop.xlane.xlu0 %300
        %s302 = sld [smem:[#allocation2]]
        %v303 = vstv %s302
        %v304 = vadd.f32 %v301, %v303
        %v305 = vrot.slane %v304, 4
        %v306 = vmax.f32 %v304, %v305
        %v307 = vrot.slane %v306, 2
        %v308 = vmax.f32 %v306, %v307
        %v309 = vrot.slane %v308, 1
        %v310 = vmax.f32 %v308, %v309
        %v311 = vsub.f32 %v304, %v310
        %v312 = vmul.f32 %v311, 1.442695
        %v313 = vpow.pop %v312
        %v314 = vrot.slane %v313, 4
        %v315 = vadd.f32 %v313, %v314
        %v316 = vrot.slane %v315, 2
        %v317 = vadd.f32 %v315, %v316
        %v318 = vrot.slane %v317, 1
        %v319 = vadd.f32 %v317, %v318
        %v320 = vrcp.pop %v319
        %v321 = vmul.f32 %v313, %v320
        %v322 = vmul.f32 %v260, %v321
        %v323 = vrot.slane %v322, 4
        %vm324 = vcmask 1047556
        %v325 = vsel %vm324, 0.0, %v323
        %v327 = vunpack.c.l.s4 1983009808
        %v328 = vunpack.c.0.s8 %v327
        %v329 = vperm.slane %v322, %v328
        %v331 = vunpack.c.l.s4 1983009808
        %v332 = vunpack.c.0.s8 %v331
        %v333 = vperm.slane %v325, %v332
        %v334 = vrot.slane %v329, 4
        %v335 = vsel %vm324, 0.0, %v334
        %v337 = vunpack.c.l.s4 1934713408
        %v338 = vunpack.c.0.s8 %v337
        %v339 = vperm.slane %v329, %v338
        %v341 = vunpack.c.l.s4 1934713408
        %v342 = vunpack.c.0.s8 %v341
        %v343 = vperm.slane %v335, %v342
        %v344 = vrot.slane %v333, 4
        %v345 = vsel %vm324, 0.0, %v344
        %v347 = vunpack.c.l.s4 1934713408
        %v348 = vunpack.c.0.s8 %v347
        %v349 = vperm.slane %v333, %v348
        %v351 = vunpack.c.l.s4 1934713408
        %v352 = vunpack.c.0.s8 %v351
        %v353 = vperm.slane %v345, %v352
        %v354 = vrot.slane %v339, 4
        %v355 = vsel %vm324, 0.0, %v354
        %v356 = vrot.slane %v343, 4
        %v357 = vsel %vm324, 0.0, %v356
        %v358 = vrot.slane %v349, 4
        %v359 = vsel %vm324, 0.0, %v358
        %v360 = vrot.slane %v353, 4
        %v361 = vsel %vm324, 0.0, %v360
        %363 = vrot.lane.b32.xlu0 %v355, 32
        %v364 = vpop.permute.xlu0 %363
        %367 = vrot.lane.b32.xlu0 %v343, 64
        %v368 = vpop.permute.xlu0 %367
        %371 = vrot.lane.b32.xlu0 %v357, 96
        %v372 = vpop.permute.xlu0 %371
        %375 = vrot.lane.b32.xlu0 %v359, 32
        %v376 = vpop.permute.xlu0 %375
        %379 = vrot.lane.b32.xlu0 %v353, 64
        %v380 = vpop.permute.xlu0 %379
        %383 = vrot.lane.b32.xlu0 %v361, 96
        %v384 = vpop.permute.xlu0 %383
        %v386 = vsel %vm269, %v339, %v364
        %vm387 = vcmask 523264
        %v388 = vsel %vm387, %v386, %v368
        %vm389 = vcmask 785408
        %v390 = vsel %vm389, %v388, %v372
        %v391 = vsel %vm269, %v349, %v376
        %v392 = vsel %vm387, %v391, %v380
        %v393 = vsel %vm389, %v392, %v384
        %v396 = vrot.slane %v393, 7
        %vm397 = vcmask 1040384
        %v398 = vsel %vm397, %v390, %v396
        %v400 = vlaneseq
        %vm401 = vcmp.ge.s32.totalorder %v400, 0
        %vm402 = vcmp.lt.s32.totalorder %v400, 256
        %vm403 = vmand %vm401, %vm402
        %404 = vst.msk [vmem:[%s259] sm:$0x3] %vm403, %v398
        %s405 = sand.u32 %s142, 1
        %s406 = scalar_lea.sflag [#allocation5], %s405
        %s407 = sand.u32 %s142, 1
        %s408 = smul.addr %s407, 2
        %s409 = scalar_lea.vmem [#allocation8], %s408
        // Predicated region
        $region49: #{tpu_custom_call.1} parent=39 // pred_check
          %p410 = pneg %p152
        $region50: #{tpu_custom_call.1} parent=39 // pred_check_branch
          %412 = sbr.rel (%p410) target = $region52
        $region51: #{tpu_custom_call.1} parent=39 // pred_region
          %414 = vsyncadd %s406, 0
          %s415 = smul.addr %s24, 2
          %s416 = scalar_lea.hbm %s5, %s415
          %s418 = sshll.u32 %s409, 4
          %s419 = int_to_ptr.vmem [resolvable:$true] %s418
          %s420 = sshll.u32 %s416, 4
          %s421 = int_to_ptr.hbm [resolvable:$true] %s420
          %423 = dma.vmem_to_hbm [thread:$0]  %s419, 32, %s421, %s406
        $region52: #{tpu_custom_call.1} parent=39 // pred_fallthru
          _
      $region40: #{tpu_custom_call.1} parent=5 // pred_fallthru
        _
      %p424 = scmp.le.s32.totalorder 2, %s19
      // Predicated region
      $region53: #{tpu_custom_call.1} parent=5 // pred_check
        %p425 = pneg %p424
      $region54: #{tpu_custom_call.1} parent=5 // pred_check_branch
        %427 = sbr.rel (%p425) target = $region56
      $region55: #{tpu_custom_call.1} parent=5 // pred_region
        %s428 = ssub.s32 %s19, 2
        // Predicated region
        $region57: #{tpu_custom_call.1} parent=55 // pred_check
          %p429 = pneg %p158
        $region58: #{tpu_custom_call.1} parent=55 // pred_check_branch
          %431 = sbr.rel (%p429) target = $region60
        $region59: #{tpu_custom_call.1} parent=55 // pred_region
          %s432 = sand.u32 %s143, 1
          %s433 = scalar_lea.sflag [#allocation5], %s432
          %s434 = sand.u32 %s143, 1
          %s435 = smul.addr %s434, 2
          %s436 = scalar_lea.vmem [#allocation8], %s435
          %438 = dma.done %s433, 32
        $region60: #{tpu_custom_call.1} parent=55 // pred_fallthru
          _
      $region56: #{tpu_custom_call.1} parent=5 // pred_fallthru
        _
    $region6: #{tpu_custom_call.1} parent=1 // loop_footer
      %s23 = sadd.s32 1, %s19
    $region7: #{tpu_custom_call.1} parent=1 // loop_footer_branch
      %18 = sbr.rel target = $region3
    $region8: #{tpu_custom_call.1} parent=1 // loop_exit
      _
    %439 = vsyncpa [#allocation4], 1
    %s440 = scalar_lea.sflag [#allocation4], 1
    %441 = vsyncpa %s440, 1
    %442 = vsyncpa [#allocation7], 1
    %443 = vsyncpa [#allocation5], 1
    %s444 = scalar_lea.sflag [#allocation5], 1
    %445 = vsyncpa %s444, 1

// kernel: tpu_custom_call.1
$region0: #{tpu_custom_call.1}
  #allocation0 [shape = 'u32[]', space=smem, size = 0x4, offset = 0x4, fixed_abs, tag = 'smem constant byte address 0x4 - core index']
  #allocation1 [shape = 'u32[72,128]{1,0:T(1,128)}', space=vmem, size = 0x9000, scoped, tag = 'internal scratch']
  #allocation2 [shape = 'f32[1]{0:T(128)S(6)}', space=smem, size = 0x200, scoped, tag = 'scoped memory for tpu_custom_call.1']
  %s0 = inlined_call_operand.hbm [shape: f32[2,8,32], index: 0, kind: input, shape index: {}]
  %s1 = inlined_call_operand.hbm [shape: f32[32,32], index: 1, kind: input, shape index: {}]
  %s2 = inlined_call_operand.vmem [shape: f32[1,32], index: 2, kind: input, shape index: {}]
  %s3 = inlined_call_operand.vmem [shape: f32[1,32], index: 3, kind: input, shape index: {}]
  %s4 = inlined_call_operand.<no memory space> [shape: f32[1], index: 4, kind: input, shape index: {}]
  %s5 = inlined_call_operand.hbm [shape: f32[2,8,32], index: 5, kind: output, shape index: {}]
  %s6 = sld [smem:[#allocation0]]
  $region61: #{tpu_custom_call.1} parent=0
    _
  %s8 = ssub.s32 1, %s6
  %s9 = scalar_select 0, %s8, %s6
  %10 = sst [smem:[#allocation2]] %s4
  $region1: #{tpu_custom_call.1} parent=0
    #allocation3 [shape = 'u8[8192]{0}', space=vmem, size = 0x2000, scoped, tag = 'input window, operand 0']
    #allocation4 [shape = 's32[2]{0}', space=sflag, size = 0x8, scoped, tag = 'scoped memory for tpu_custom_call.1']
    #allocation5 [shape = 's32[2]{0}', space=sflag, size = 0x8, scoped, tag = 'scoped memory for tpu_custom_call.1']
    #allocation6 [shape = 'u8[16384]{0}', space=vmem, size = 0x4000, scoped, tag = 'input window, operand 1, single buffered']
    #allocation7 [shape = 's32[1]{0}', space=sflag, size = 0x4, scoped, tag = 'scoped memory for tpu_custom_call.1']
    #allocation8 [shape = 'u8[8192]{0}', space=vmem, size = 0x2000, scoped, tag = 'output window, operand 0']
    %11 = vsyncpa [#allocation4], 0
    %s12 = scalar_lea.sflag [#allocation4], 1
    %13 = vsyncpa %s12, 0
    %14 = vsyncpa [#allocation7], 0
    %15 = vsyncpa [#allocation5], 0
    %s16 = scalar_lea.sflag [#allocation5], 1
    %17 = vsyncpa %s16, 0
    loop: start=0, step=1, limit=4
    $region2: #{tpu_custom_call.1} parent=1 // loop_pre_header
      _
    $region3: #{tpu_custom_call.1} parent=1 // loop_header
      %s19 = sphi 0, %s23
      %p20 = scmp.ge.s32.totalorder %s19, 4
      %s29 = sphi 0, %s31
      %s32 = sphi 0, %s29
      %s33 = sphi 0, %s32
      %s49 = sphi 0, %s33
      %s53 = sphi 0, %s53
      %s55 = sphi 0, %s53
      %s56 = sphi 0, %s55
      %s70 = sphi 0, %s56
      %s74 = sphi 0, %s74
      %s76 = sphi 0, %s74
      %s77 = sphi 0, %s76
      %s91 = sphi 0, %s77
      %s95 = sphi 0, %s95
      %s97 = sphi 0, %s95
      %s98 = sphi 0, %s97
      %s112 = sphi 0, %s98
      %s116 = sphi 0, %s116
      %s118 = sphi 0, %s116
      %s119 = sphi 0, %s118
      %s133 = sphi 0, %s119
      %s139 = sphi 0, %s141
      %s142 = sphi 0, %s139
      %s143 = sphi 0, %s142
      %s159 = sphi 0, %s143
    $region4: #{tpu_custom_call.1} parent=1 // loop_header_branch
      %22 = sbr.rel (%p20) target = $region8
    $region5: #{tpu_custom_call.1} parent=1 // loop_body
      %s24 = ssub.s32 %s19, 1
      %s25 = ssub.s32 %s19, 2
      %s26 = sadd.s32 %s19, 1
      %s27 = ssub.s32 %s19, %s26
      %p28 = scmp.eq.s32.totalorder %s27, 0
      %s30 = sadd.s32 %s29, 1
      %s31 = scalar_select %p28, %s29, %s30
      %p34 = pneg %p28
      %p35 = scmp.eq.s32.totalorder %s19, 1
      %p36 = por %p34, %p35
      %p37 = scmp.ne.s32.totalorder %s29, %s32
      %p38 = scmp.eq.s32.totalorder %s19, 0
      %p39 = por %p37, %p38
      %p40 = scmp.ne.s32.totalorder %s29, %s32
      %p41 = scmp.eq.s32.totalorder %s24, 1
      %p42 = por %p40, %p41
      %p43 = scmp.ne.s32.totalorder %s32, %s33
      %p44 = scmp.eq.s32.totalorder %s24, 0
      %p45 = por %p43, %p44
      %p46 = scmp.ne.s32.totalorder %s32, %s33
      %p47 = scmp.eq.s32.totalorder %s25, 1
      %p48 = por %p46, %p47
      %p50 = scmp.ne.s32.totalorder %s33, %s49
      %p51 = scmp.eq.s32.totalorder %s25, 0
      %p52 = por %p50, %p51
      %s54 = sadd.s32 %s53, 1
      %p57 = scmp.eq.s32.totalorder %s19, 1
      %p58 = scmp.ne.s32.totalorder %s53, %s55
      %p59 = scmp.eq.s32.totalorder %s19, 0
      %p60 = por %p58, %p59
      %p61 = scmp.ne.s32.totalorder %s53, %s55
      %p62 = scmp.eq.s32.totalorder %s24, 1
      %p63 = por %p61, %p62
      %p64 = scmp.ne.s32.totalorder %s55, %s56
      %p65 = scmp.eq.s32.totalorder %s24, 0
      %p66 = por %p64, %p65
      %p67 = scmp.ne.s32.totalorder %s55, %s56
      %p68 = scmp.eq.s32.totalorder %s25, 1
      %p69 = por %p67, %p68
      %p71 = scmp.ne.s32.totalorder %s56, %s70
      %p72 = scmp.eq.s32.totalorder %s25, 0
      %p73 = por %p71, %p72
      %s75 = sadd.s32 %s74, 1
      %p78 = scmp.eq.s32.totalorder %s19, 1
      %p79 = scmp.ne.s32.totalorder %s74, %s76
      %p80 = scmp.eq.s32.totalorder %s19, 0
      %p81 = por %p79, %p80
      %p82 = scmp.ne.s32.totalorder %s74, %s76
      %p83 = scmp.eq.s32.totalorder %s24, 1
      %p84 = por %p82, %p83
      %p85 = scmp.ne.s32.totalorder %s76, %s77
      %p86 = scmp.eq.s32.totalorder %s24, 0
      %p87 = por %p85, %p86
      %p88 = scmp.ne.s32.totalorder %s76, %s77
      %p89 = scmp.eq.s32.totalorder %s25, 1
      %p90 = por %p88, %p89
      %p92 = scmp.ne.s32.totalorder %s77, %s91
      %p93 = scmp.eq.s32.totalorder %s25, 0
      %p94 = por %p92, %p93
      %s96 = sadd.s32 %s95, 1
      %p99 = scmp.eq.s32.totalorder %s19, 1
      %p100 = scmp.ne.s32.totalorder %s95, %s97
      %p101 = scmp.eq.s32.totalorder %s19, 0
      %p102 = por %p100, %p101
      %p103 = scmp.ne.s32.totalorder %s95, %s97
      %p104 = scmp.eq.s32.totalorder %s24, 1
      %p105 = por %p103, %p104
      %p106 = scmp.ne.s32.totalorder %s97, %s98
      %p107 = scmp.eq.s32.totalorder %s24, 0
      %p108 = por %p106, %p107
      %p109 = scmp.ne.s32.totalorder %s97, %s98
      %p110 = scmp.eq.s32.totalorder %s25, 1
      %p111 = por %p109, %p110
      %p113 = scmp.ne.s32.totalorder %s98, %s112
      %p114 = scmp.eq.s32.totalorder %s25, 0
      %p115 = por %p113, %p114
      %s117 = sadd.s32 %s116, 1
      %p120 = scmp.eq.s32.totalorder %s19, 1
      %p121 = scmp.ne.s32.totalorder %s116, %s118
      %p122 = scmp.eq.s32.totalorder %s19, 0
      %p123 = por %p121, %p122
      %p124 = scmp.ne.s32.totalorder %s116, %s118
      %p125 = scmp.eq.s32.totalorder %s24, 1
      %p126 = por %p124, %p125
      %p127 = scmp.ne.s32.totalorder %s118, %s119
      %p128 = scmp.eq.s32.totalorder %s24, 0
      %p129 = por %p127, %p128
      %p130 = scmp.ne.s32.totalorder %s118, %s119
      %p131 = scmp.eq.s32.totalorder %s25, 1
      %p132 = por %p130, %p131
      %p134 = scmp.ne.s32.totalorder %s119, %s133
      %p135 = scmp.eq.s32.totalorder %s25, 0
      %p136 = por %p134, %p135
      %s137 = ssub.s32 %s19, %s26
      %p138 = scmp.eq.s32.totalorder %s137, 0
      %s140 = sadd.s32 %s139, 1
      %s141 = scalar_select %p138, %s139, %s140
      %p144 = pneg %p138
      %p145 = scmp.eq.s32.totalorder %s19, 1
      %p146 = por %p144, %p145
      %p147 = scmp.ne.s32.totalorder %s139, %s142
      %p148 = scmp.eq.s32.totalorder %s19, 0
      %p149 = por %p147, %p148
      %p150 = scmp.ne.s32.totalorder %s139, %s142
      %p151 = scmp.eq.s32.totalorder %s24, 1
      %p152 = por %p150, %p151
      %p153 = scmp.ne.s32.totalorder %s142, %s143
      %p154 = scmp.eq.s32.totalorder %s24, 0
      %p155 = por %p153, %p154
      %p156 = scmp.ne.s32.totalorder %s142, %s143
      %p157 = scmp.eq.s32.totalorder %s25, 1
      %p158 = por %p156, %p157
      %p160 = scmp.ne.s32.totalorder %s143, %s159
      %p161 = scmp.eq.s32.totalorder %s25, 0
      %p162 = por %p160, %p161
      %p163 = scmp.le.s32.totalorder 1, %s19
      %p164 = scmp.lt.s32.totalorder %s19, 3
      %p165 = pnand %p163, %p164
      %p166 = pneg %p165
      // Predicated region
      $region9: #{tpu_custom_call.1} parent=5 // pred_check
        _
      $region10: #{tpu_custom_call.1} parent=5 // pred_check_branch
        %168 = sbr.rel (%p165) target = $region12
      $region11: #{tpu_custom_call.1} parent=5 // pred_region
        %s169 = ssub.s32 %s19, 1
        // Predicated region
        $region13: #{tpu_custom_call.1} parent=11 // pred_check
          %p170 = pneg %p66
        $region14: #{tpu_custom_call.1} parent=11 // pred_check_branch
          %172 = sbr.rel (%p170) target = $region16
        $region15: #{tpu_custom_call.1} parent=11 // pred_region
          %174 = vsyncadd [#allocation7], 0
          %s175 = sshll.u32 %s1, 4
          %s176 = int_to_ptr.hbm [resolvable:$true] %s175
          %s177 = sshll.u32 [#allocation6], 4
          %s178 = int_to_ptr.vmem [resolvable:$true] %s177
          %183 = dma.hbm_to_vmem [thread:$0]  %s176, 512, %s178, [#allocation7], 128, 128, 8
        $region16: #{tpu_custom_call.1} parent=11 // pred_fallthru
          _
        // Predicated region
        $region17: #{tpu_custom_call.1} parent=11 // pred_check
          %p184 = pneg %p87
        $region18: #{tpu_custom_call.1} parent=11 // pred_check_branch
          %186 = sbr.rel (%p184) target = $region20
        $region19: #{tpu_custom_call.1} parent=11 // pred_region
          _
        $region20: #{tpu_custom_call.1} parent=11 // pred_fallthru
          _
        // Predicated region
        $region21: #{tpu_custom_call.1} parent=11 // pred_check
          %p187 = pneg %p108
        $region22: #{tpu_custom_call.1} parent=11 // pred_check_branch
          %189 = sbr.rel (%p187) target = $region24
        $region23: #{tpu_custom_call.1} parent=11 // pred_region
          _
        $region24: #{tpu_custom_call.1} parent=11 // pred_fallthru
          _
        // Predicated region
        $region25: #{tpu_custom_call.1} parent=11 // pred_check
          %p190 = pneg %p129
        $region26: #{tpu_custom_call.1} parent=11 // pred_check_branch
          %192 = sbr.rel (%p190) target = $region28
        $region27: #{tpu_custom_call.1} parent=11 // pred_region
          _
        $region28: #{tpu_custom_call.1} parent=11 // pred_fallthru
          _
      $region12: #{tpu_custom_call.1} parent=5 // pred_fallthru
        _
      %p193 = scmp.lt.s32.totalorder %s19, 2
      // Predicated region
      $region29: #{tpu_custom_call.1} parent=5 // pred_check
        %p194 = pneg %p193
      $region30: #{tpu_custom_call.1} parent=5 // pred_check_branch
        %196 = sbr.rel (%p194) target = $region32
      $region31: #{tpu_custom_call.1} parent=5 // pred_region
        // Predicated region
        $region33: #{tpu_custom_call.1} parent=31 // pred_check
          %p197 = pneg %p39
        $region34: #{tpu_custom_call.1} parent=31 // pred_check_branch
          %199 = sbr.rel (%p197) target = $region36
        $region35: #{tpu_custom_call.1} parent=31 // pred_region
          %s200 = sand.u32 %s29, 1
          %s201 = scalar_lea.sflag [#allocation4], %s200
          %s202 = sand.u32 %s29, 1
          %s203 = smul.addr %s202, 8
          %s204 = scalar_lea.vmem [#allocation3], %s203
          %206 = vsyncadd %s201, 0
          %s207 = smul.addr %s19, 8
          %s208 = scalar_lea.hbm %s0, %s207
          %s210 = sshll.u32 %s208, 4
          %s211 = int_to_ptr.hbm [resolvable:$true] %s210
          %s212 = sshll.u32 %s204, 4
          %s213 = int_to_ptr.vmem [resolvable:$true] %s212
          %215 = dma.hbm_to_vmem [thread:$0]  %s211, 128, %s213, %s201
        $region36: #{tpu_custom_call.1} parent=31 // pred_fallthru
          _
      $region32: #{tpu_custom_call.1} parent=5 // pred_fallthru
        _
      %p216 = scmp.le.s32.totalorder 1, %s19
      %p217 = scmp.lt.s32.totalorder %s19, 3
      %p218 = pnand %p216, %p217
      %p219 = pneg %p218
      // Predicated region
      $region37: #{tpu_custom_call.1} parent=5 // pred_check
        _
      $region38: #{tpu_custom_call.1} parent=5 // pred_check_branch
        %221 = sbr.rel (%p218) target = $region40
      $region39: #{tpu_custom_call.1} parent=5 // pred_region
        %s222 = ssub.s32 %s19, 1
        %s223 = sand.u32 %s32, 1
        %s224 = scalar_lea.sflag [#allocation4], %s223
        %s225 = sand.u32 %s32, 1
        %s226 = smul.addr %s225, 8
        %s227 = scalar_lea.vmem [#allocation3], %s226
        // Predicated region
        $region41: #{tpu_custom_call.1} parent=39 // pred_check
          %p228 = pneg %p45
        $region42: #{tpu_custom_call.1} parent=39 // pred_check_branch
          %230 = sbr.rel (%p228) target = $region44
        $region43: #{tpu_custom_call.1} parent=39 // pred_region
          %232 = dma.done %s224, 128
        $region44: #{tpu_custom_call.1} parent=39 // pred_fallthru
          _
        // Predicated region
        $region45: #{tpu_custom_call.1} parent=39 // pred_check
          %p233 = pneg %p66
        $region46: #{tpu_custom_call.1} parent=39 // pred_check_branch
          %235 = sbr.rel (%p233) target = $region48
        $region47: #{tpu_custom_call.1} parent=39 // pred_region
          %237 = dma.done [#allocation7], 512
        $region48: #{tpu_custom_call.1} parent=39 // pred_fallthru
          _
        %s238 = sand.u32 %s32, 1
        %s239 = scalar_lea.sflag [#allocation4], %s238
        %s240 = sand.u32 %s32, 1
        %s241 = smul.addr %s240, 8
        %s242 = scalar_lea.vmem [#allocation3], %s241
        %p243 = pneg %p45
        %p244 = pneg %p42
        %p245 = pneg %p66
        %p246 = pneg %p63
        %p247 = pneg %p87
        %p248 = pneg %p84
        %p249 = pneg %p108
        %p250 = pneg %p105
        %p251 = pneg %p129
        %p252 = pneg %p126
        %p253 = pneg %p155
        %p254 = pneg %p152
        %s255 = sand.u32 %s142, 1
        %s256 = scalar_lea.sflag [#allocation5], %s255
        %s257 = sand.u32 %s142, 1
        %s258 = smul.addr %s257, 8
        %s259 = scalar_lea.vmem [#allocation8], %s258
        %v260 = vld [vmem:[%s227] sm:$0xff]
        %v261 = vld [vmem:[#allocation6] sm:$0xff]
        %v262 = vld [vmem:[#allocation6 + $0x8] sm:$0xff]
        %v263 = vld [vmem:[#allocation6 + $0x10] sm:$0xff]
        %v264 = vld [vmem:[#allocation6 + $0x18] sm:$0xff]
        %v265 = vld [vmem:[%s2] sm:$0x1]
        %v267 = vperm.slane %v265, 0
        %vm269 = vcmask 261120
        %v271 = vsel %vm269, %v260, 0
        %273 = vmatpush.msra.mxu0 0.0
        %274 = vmatpush.msra.mxu0 0.0
        %275 = vmatpush.msra.mxu0 0.0
        %276 = vmatpush.msra.mxu0 0.0
        %277 = vmatpush.msra.mxu0 0.0
        %278 = vmatpush.msra.mxu0 0.0
        %279 = vmatpush.msra.mxu0 0.0
        %280 = vmatpush.msra.mxu0 0.0
        %281 = vmatpush.msra.mxu0 0.0
        %282 = vmatpush.msra.mxu0 0.0
        %283 = vmatpush.msra.mxu0 0.0
        %284 = vmatpush.msra.mxu0 0.0
        %285 = vmatpush.msra.mxu0 %v264
        %286 = vmatpush.msra.mxu0 %v263
        %287 = vmatpush.msra.mxu0 %v262
        %288 = vmatpush.msra.mxu0 %v261
        %289 = vmatmul.f32.gmra.mxu0 %v271
        %v290 = vpop.f32.mrf.mxu0
        %v291 = vadd.f32 %v267, %v290
        %292 = vdwg.mxu0
        %v293 = vmax.f32 %v291, 0.0
        %v294 = vld [vmem:[%s3] sm:$0x1]
        %v296 = vperm.slane %v294, 0
        %v298 = vmul.f32 %v293, %v296
        %v299 = vsel %vm269, %v298, 0.0
        %300 = vadd.xlane.f32.xlu0 %v299
        %v301 = vpop.xlane.xlu0 %300
        %s302 = sld [smem:[#allocation2]]
        %v303 = vstv %s302
        %v304 = vadd.f32 %v301, %v303
        %v305 = vrot.slane %v304, 4
        %v306 = vmax.f32 %v304, %v305
        %v307 = vrot.slane %v306, 2
        %v308 = vmax.f32 %v306, %v307
        %v309 = vrot.slane %v308, 1
        %v310 = vmax.f32 %v308, %v309
        %v311 = vsub.f32 %v304, %v310
        %v312 = vmul.f32 %v311, 1.442695
        %v313 = vpow.pop %v312
        %v314 = vrot.slane %v313, 4
        %v315 = vadd.f32 %v313, %v314
        %v316 = vrot.slane %v315, 2
        %v317 = vadd.f32 %v315, %v316
        %v318 = vrot.slane %v317, 1
        %v319 = vadd.f32 %v317, %v318
        %v320 = vrcp.pop %v319
        %v321 = vmul.f32 %v313, %v320
        %v322 = vmul.f32 %v260, %v321
        %323 = vst.msk [vmem:[%s259] sm:$0xff] %vm269, %v322
        %s324 = sand.u32 %s142, 1
        %s325 = scalar_lea.sflag [#allocation5], %s324
        %s326 = sand.u32 %s142, 1
        %s327 = smul.addr %s326, 8
        %s328 = scalar_lea.vmem [#allocation8], %s327
        // Predicated region
        $region49: #{tpu_custom_call.1} parent=39 // pred_check
          %p329 = pneg %p152
        $region50: #{tpu_custom_call.1} parent=39 // pred_check_branch
          %331 = sbr.rel (%p329) target = $region52
        $region51: #{tpu_custom_call.1} parent=39 // pred_region
          %333 = vsyncadd %s325, 0
          %s334 = smul.addr %s24, 8
          %s335 = scalar_lea.hbm %s5, %s334
          %s337 = sshll.u32 %s328, 4
          %s338 = int_to_ptr.vmem [resolvable:$true] %s337
          %s339 = sshll.u32 %s335, 4
          %s340 = int_to_ptr.hbm [resolvable:$true] %s339
          %342 = dma.vmem_to_hbm [thread:$0]  %s338, 128, %s340, %s325
        $region52: #{tpu_custom_call.1} parent=39 // pred_fallthru
          _
      $region40: #{tpu_custom_call.1} parent=5 // pred_fallthru
        _
      %p343 = scmp.le.s32.totalorder 2, %s19
      // Predicated region
      $region53: #{tpu_custom_call.1} parent=5 // pred_check
        %p344 = pneg %p343
      $region54: #{tpu_custom_call.1} parent=5 // pred_check_branch
        %346 = sbr.rel (%p344) target = $region56
      $region55: #{tpu_custom_call.1} parent=5 // pred_region
        %s347 = ssub.s32 %s19, 2
        // Predicated region
        $region57: #{tpu_custom_call.1} parent=55 // pred_check
          %p348 = pneg %p158
        $region58: #{tpu_custom_call.1} parent=55 // pred_check_branch
          %350 = sbr.rel (%p348) target = $region60
        $region59: #{tpu_custom_call.1} parent=55 // pred_region
          %s351 = sand.u32 %s143, 1
          %s352 = scalar_lea.sflag [#allocation5], %s351
          %s353 = sand.u32 %s143, 1
          %s354 = smul.addr %s353, 8
          %s355 = scalar_lea.vmem [#allocation8], %s354
          %357 = dma.done %s352, 128
        $region60: #{tpu_custom_call.1} parent=55 // pred_fallthru
          _
      $region56: #{tpu_custom_call.1} parent=5 // pred_fallthru
        _
    $region6: #{tpu_custom_call.1} parent=1 // loop_footer
      %s23 = sadd.s32 1, %s19
    $region7: #{tpu_custom_call.1} parent=1 // loop_footer_branch
      %18 = sbr.rel target = $region3
    $region8: #{tpu_custom_call.1} parent=1 // loop_exit
      _
    %358 = vsyncpa [#allocation4], 1
    %s359 = scalar_lea.sflag [#allocation4], 1
    %360 = vsyncpa %s359, 1
    %361 = vsyncpa [#allocation7], 1
    %362 = vsyncpa [#allocation5], 1
    %s363 = scalar_lea.sflag [#allocation5], 1
    %364 = vsyncpa %s363, 1

</llo_original>
